<compile_context>
chip_gen: v6e
topology: v6e:2x2x1
jax: 0.10.0
libtpu: 0.0.40
codegen_flags: <defaults>
</compile_context>

<pallas_src>
import functools
import math

import jax
import jax.numpy as jnp
from jax.experimental import pallas as pl
from jax.experimental.pallas import tpu as pltpu


def _calc_pm_kernel(x_ref, w_ref, noise_ref, out_ref, *, dim):
    """One row tile: out = x0 + (x0 @ W)[:, :dim] + (x0 @ W)[:, dim:] * noise.

    W = [dt*A | sqrt(dt)*rand_strength*B] is pre-fused / pre-scaled on host,
    so the drift and diffusion scalars cost nothing inside the kernel.
    """
    x0 = x_ref[...]
    # Single fused matmul: (tile_n, dim) @ (dim, 2*dim) -> (tile_n, 2*dim).
    fused = jnp.dot(x0, w_ref[...], preferred_element_type=jnp.float32)
    drift = fused[:, :dim]        # already scaled by dt
    diffusion = fused[:, dim:]    # already scaled by sqrt(dt) * rand_strength
    out_ref[...] = (x0 + drift + diffusion * noise_ref[...]).astype(out_ref.dtype)


def calc_pm_step(x0, A, B, noise, *, dt=0.01, rand_strength=0.1, tile_n=256):
    """Computes the modeled calc_pm output (the tensor stored at std_input[9])."""
    N, dim = x0.shape
    assert A.shape == (dim, dim) and B.shape == (dim, dim)
    assert noise.shape == (N, dim)

    # Large row tiles amortize weight push + per-grid-step overhead; for small
    # problems (e.g. N=16) this collapses to a single grid invocation.
    tile_n = min(tile_n, N)
    assert N % tile_n == 0, "N must be divisible by the row tile"
    assert tile_n % 8 == 0 or tile_n == N, "row tile must respect (8,128) tiling"

    # Host-side fusion: one 256-column weight, scalars folded in.
    w_fused = jnp.concatenate(
        [dt * A, (math.sqrt(dt) * rand_strength) * B], axis=1
    ).astype(jnp.float32)

    grid = (N // tile_n,)
    kernel = functools.partial(_calc_pm_kernel, dim=dim)

    cost = pl.CostEstimate(
        flops=2 * N * dim * (2 * dim),
        transcendentals=0,
        bytes_accessed=(3 * N * dim + dim * 2 * dim) * 4,
    )

    return pl.pallas_call(
        kernel,
        grid=grid,
        in_specs=[
            pl.BlockSpec((tile_n, dim), lambda i: (i, 0)),      # x0 tile
            pl.BlockSpec((dim, 2 * dim), lambda i: (0, 0)),     # fused weight
            pl.BlockSpec((tile_n, dim), lambda i: (i, 0)),      # noise tile
        ],
        out_specs=pl.BlockSpec((tile_n, dim), lambda i: (i, 0)),  # new state
        out_shape=jax.ShapeDtypeStruct((N, dim), x0.dtype),
        compiler_params=pltpu.CompilerParams(
            dimension_semantics=("parallel",)),
        cost_estimate=cost,
    )(x0, w_fused, noise)


def local_max_forward(std_input, A, B, *, dt=0.01, rand_strength=0.1):
    """Mirrors local_max.forward: std_input[9] = calc_pm(std_input)."""
    x0 = std_input[0]
    noise = std_input[6]
    std_input[9] = calc_pm_step(x0, A, B, noise, dt=dt,
                                rand_strength=rand_strength)
    return std_input


if __name__ == "__main__":
    # Small deterministic setup: ensemble of N=16 states, state dimension 128.
    N, dim = 16, 128
    dt = 0.01
    rand_strength = 0.1

    key = jax.random.PRNGKey(0)
    kx, ka, kb, kn = jax.random.split(key, 4)
    x0 = jax.random.normal(kx, (N, dim), dtype=jnp.float32)
    A = 0.05 * jax.random.normal(ka, (dim, dim), dtype=jnp.float32)
    B = 0.05 * jax.random.normal(kb, (dim, dim), dtype=jnp.float32)
    noise = jax.random.normal(kn, (N, dim), dtype=jnp.float32)

    # std_input list as used by the original module (only the slots we model).
    std_input = [None] * 10
    std_input[0] = x0
    std_input[6] = noise

    std_input = local_max_forward(std_input, A, B, dt=dt,
                                  rand_strength=rand_strength)
    out = jax.block_until_ready(std_input[9])

    # Pure-JAX reference.
    ref = (x0 + dt * (x0 @ A)
           + math.sqrt(dt) * rand_strength * (x0 @ B) * noise)
    assert out.shape == (N, dim)
    assert bool(jnp.all(jnp.isfinite(out))), "non-finite output"
    assert jnp.allclose(out, ref, rtol=1e-3, atol=1e-3), "mismatch vs reference"

    print("KERNEL_OK")
</pallas_src>

<mosaic_0001>
module attributes {stable_mosaic.version = 11 : i64} {
  func.func @_calc_pm_kernel(%arg0: i32, %arg1: memref<16x128xf32, #tpu.memory_space<vmem>>, %arg2: memref<128x256xf32, #tpu.memory_space<vmem>>, %arg3: memref<16x128xf32, #tpu.memory_space<vmem>>, %arg4: memref<16x128xf32, #tpu.memory_space<vmem>>) attributes {dimension_semantics = [#tpu.dimension_semantics<parallel>], iteration_bounds = array<i64: 1>, scalar_prefetch = 0 : i64, scratch_operands = 0 : i64, tpu.core_type = #tpu.core_type<tc>, window_params = [{transform_indices = @transform_0, window_bounds = array<i64: 16, 128>}, {pipeline_mode = #tpu.pipeline_mode<synchronous>, transform_indices = @transform_1, window_bounds = array<i64: 128, 256>}, {transform_indices = @transform_2, window_bounds = array<i64: 16, 128>}, {transform_indices = @transform_3, window_bounds = array<i64: 16, 128>}]} {
    %c0 = arith.constant 0 : index
    %c0_0 = arith.constant 0 : index
    %0 = vector.load %arg1[%c0, %c0_0] : memref<16x128xf32, #tpu.memory_space<vmem>>, vector<16x128xf32>
    %c0_1 = arith.constant 0 : index
    %c0_2 = arith.constant 0 : index
    %1 = vector.load %arg2[%c0_1, %c0_2] : memref<128x256xf32, #tpu.memory_space<vmem>>, vector<128x256xf32>
    %cst = arith.constant dense<0.000000e+00> : vector<16x256xf32>
    %2 = tpu.matmul %0, %1, %cst {dimension_numbers = #tpu.dot_dimension_numbers<[1], [0], [0], [1], [0, 0, 1, 1], [], []>} : vector<16x128xf32>, vector<128x256xf32>, vector<16x256xf32> -> vector<16x256xf32>
    %3 = vector.extract_strided_slice %2 {offsets = [0, 0], sizes = [16, 128], strides = [1, 1]} : vector<16x256xf32> to vector<16x128xf32>
    %4 = vector.extract_strided_slice %2 {offsets = [0, 128], sizes = [16, 128], strides = [1, 1]} : vector<16x256xf32> to vector<16x128xf32>
    %5 = arith.addf %0, %3 : vector<16x128xf32>
    %c0_3 = arith.constant 0 : index
    %c0_4 = arith.constant 0 : index
    %6 = vector.load %arg3[%c0_3, %c0_4] : memref<16x128xf32, #tpu.memory_space<vmem>>, vector<16x128xf32>
    %7 = arith.mulf %4, %6 : vector<16x128xf32>
    %8 = arith.addf %5, %7 : vector<16x128xf32>
    %c0_5 = arith.constant 0 : index
    %c0_6 = arith.constant 0 : index
    %9 = vector.load %arg4[%c0_5, %c0_6] : memref<16x128xf32, #tpu.memory_space<vmem>>, vector<16x128xf32>
    tpu.vector_store %arg4[%c0_5, %c0_6], %8 {strides = array<i32>} : memref<16x128xf32, #tpu.memory_space<vmem>>, vector<16x128xf32>,
    return
  }
  func.func @transform_0(%arg0: i32) -> (i32, i32) {
    %c0_i32 = arith.constant 0 : i32
    %c0_i32_0 = arith.constant 0 : i32
    return %arg0, %c0_i32 : i32, i32
  }
  func.func @transform_1(%arg0: i32) -> (i32, i32) {
    %c0_i32 = arith.constant 0 : i32
    %c0_i32_0 = arith.constant 0 : i32
    %c0_i32_1 = arith.constant 0 : i32
    return %c0_i32, %c0_i32_0 : i32, i32
  }
  func.func @transform_2(%arg0: i32) -> (i32, i32) {
    %c0_i32 = arith.constant 0 : i32
    %c0_i32_0 = arith.constant 0 : i32
    return %arg0, %c0_i32 : i32, i32
  }
  func.func @transform_3(%arg0: i32) -> (i32, i32) {
    %c0_i32 = arith.constant 0 : i32
    %c0_i32_0 = arith.constant 0 : i32
    return %arg0, %c0_i32 : i32, i32
  }
}

</mosaic_0001>

<llo_original>
// kernel: tpu_custom_call.1
$region0: #{tpu_custom_call.1}
  #allocation0 [shape = 'u32[]', space=smem, size = 0x4, offset = 0x4, fixed_abs, tag = 'smem constant byte address 0x4 - core index']
  #allocation1 [shape = 'u32[144,128]{1,0:T(1,128)}', space=vmem, size = 0x12000, scoped, tag = 'internal scratch']
  %s0 = inlined_call_operand.hbm [shape: f32[16,128], index: 0, kind: input, shape index: {}]
  %s1 = inlined_call_operand.hbm [shape: f32[128,256], index: 1, kind: input, shape index: {}]
  %s2 = inlined_call_operand.hbm [shape: f32[16,128], index: 2, kind: input, shape index: {}]
  %s3 = inlined_call_operand.hbm [shape: f32[16,128], index: 3, kind: output, shape index: {}]
  %s4 = sld [smem:[#allocation0]]
  $region34: #{tpu_custom_call.1} parent=0
    _
  %s6 = ssub.s32 1, %s4
  %s7 = scalar_select 0, %s6, %s4
  $region1: #{tpu_custom_call.1} parent=0
    #allocation2 [shape = 'u8[8192]{0}', space=vmem, size = 0x2000, scoped, tag = 'input window, operand 0, single buffered']
    #allocation3 [shape = 's32[1]{0}', space=sflag, size = 0x4, scoped, tag = 'scoped memory for tpu_custom_call.1']
    #allocation4 [shape = 's32[1]{0}', space=sflag, size = 0x4, scoped, tag = 'scoped memory for tpu_custom_call.1']
    #allocation5 [shape = 'u8[131072]{0}', space=vmem, size = 0x20000, scoped, tag = 'input window, operand 1, single buffered']
    #allocation6 [shape = 's32[1]{0}', space=sflag, size = 0x4, scoped, tag = 'scoped memory for tpu_custom_call.1']
    #allocation7 [shape = 'u8[8192]{0}', space=vmem, size = 0x2000, scoped, tag = 'input window, operand 2, single buffered']
    #allocation8 [shape = 'u8[8192]{0}', space=vmem, size = 0x2000, scoped, tag = 'output window, operand 0, single buffered']
    %8 = vsyncpa [#allocation3], 0
    %9 = vsyncpa [#allocation6], 0
    %10 = vsyncpa [#allocation4], 0
    // Predicated region
    $region2: #{tpu_custom_call.1} parent=1 // pred_check
      _
    $region3: #{tpu_custom_call.1} parent=1 // pred_check_branch
      %12 = sbr.rel (0) target = $region5
    $region4: #{tpu_custom_call.1} parent=1 // pred_region
      %s14 = ssub.s32 256, 256
      %15 = vsyncadd [#allocation3], %s14
      %s16 = sshll.u32 [#allocation2], 4
      %s17 = int_to_ptr.vmem [resolvable:$true] %s16
      %22 = dma.hbm_to_vmem [thread:$0]  %s0, 256, %s17, [#allocation3], 128, 128, 8
    $region5: #{tpu_custom_call.1} parent=1 // pred_fallthru
      _
    // Predicated region
    $region6: #{tpu_custom_call.1} parent=1 // pred_check
      _
    $region7: #{tpu_custom_call.1} parent=1 // pred_check_branch
      %24 = sbr.rel (0) target = $region9
    $region8: #{tpu_custom_call.1} parent=1 // pred_region
      %s26 = ssub.s32 4096, 4096
      %27 = vsyncadd [#allocation6], %s26
      %s28 = sshll.u32 [#allocation5], 4
      %s29 = int_to_ptr.vmem [resolvable:$true] %s28
      %34 = dma.hbm_to_vmem [thread:$0]  %s1, 4096, %s29, [#allocation6], 256, 256, 16
    $region9: #{tpu_custom_call.1} parent=1 // pred_fallthru
      _
    // Predicated region
    $region10: #{tpu_custom_call.1} parent=1 // pred_check
      _
    $region11: #{tpu_custom_call.1} parent=1 // pred_check_branch
      %36 = sbr.rel (0) target = $region13
    $region12: #{tpu_custom_call.1} parent=1 // pred_region
      %s38 = ssub.s32 256, 256
      %39 = vsyncadd [#allocation6], %s38
      %s40 = sshll.u32 [#allocation7], 4
      %s41 = int_to_ptr.vmem [resolvable:$true] %s40
      %46 = dma.hbm_to_vmem [thread:$0]  %s2, 256, %s41, [#allocation6], 128, 128, 8
    $region13: #{tpu_custom_call.1} parent=1 // pred_fallthru
      _
    // Predicated region
    $region14: #{tpu_custom_call.1} parent=1 // pred_check
      _
    $region15: #{tpu_custom_call.1} parent=1 // pred_check_branch
      %48 = sbr.rel (0) target = $region17
    $region16: #{tpu_custom_call.1} parent=1 // pred_region
      %49 = dma.done [#allocation3], 256
    $region17: #{tpu_custom_call.1} parent=1 // pred_fallthru
      _
    // Predicated region
    $region18: #{tpu_custom_call.1} parent=1 // pred_check
      _
    $region19: #{tpu_custom_call.1} parent=1 // pred_check_branch
      %51 = sbr.rel (0) target = $region21
    $region20: #{tpu_custom_call.1} parent=1 // pred_region
      %52 = dma.done [#allocation6], 4096
    $region21: #{tpu_custom_call.1} parent=1 // pred_fallthru
      _
    // Predicated region
    $region22: #{tpu_custom_call.1} parent=1 // pred_check
      _
    $region23: #{tpu_custom_call.1} parent=1 // pred_check_branch
      %54 = sbr.rel (0) target = $region25
    $region24: #{tpu_custom_call.1} parent=1 // pred_region
      %55 = dma.done [#allocation6], 256
    $region25: #{tpu_custom_call.1} parent=1 // pred_fallthru
      _
    %v56 = vld [vmem:[#allocation2] sm:$0xff]
    %v57 = vld [vmem:[#allocation2 + $0x8] sm:$0xff]
    %v58 = vld [vmem:[#allocation5] sm:$0xff]
    %v59 = vld [vmem:[#allocation5 + $0x8] sm:$0xff]
    %v60 = vld [vmem:[#allocation5 + $0x10] sm:$0xff]
    %v61 = vld [vmem:[#allocation5 + $0x18] sm:$0xff]
    %v62 = vld [vmem:[#allocation5 + $0x20] sm:$0xff]
    %v63 = vld [vmem:[#allocation5 + $0x28] sm:$0xff]
    %v64 = vld [vmem:[#allocation5 + $0x30] sm:$0xff]
    %v65 = vld [vmem:[#allocation5 + $0x38] sm:$0xff]
    %v66 = vld [vmem:[#allocation5 + $0x40] sm:$0xff]
    %v67 = vld [vmem:[#allocation5 + $0x48] sm:$0xff]
    %v68 = vld [vmem:[#allocation5 + $0x50] sm:$0xff]
    %v69 = vld [vmem:[#allocation5 + $0x58] sm:$0xff]
    %v70 = vld [vmem:[#allocation5 + $0x60] sm:$0xff]
    %v71 = vld [vmem:[#allocation5 + $0x68] sm:$0xff]
    %v72 = vld [vmem:[#allocation5 + $0x70] sm:$0xff]
    %v73 = vld [vmem:[#allocation5 + $0x78] sm:$0xff]
    %v74 = vld [vmem:[#allocation5 + $0x80] sm:$0xff]
    %v75 = vld [vmem:[#allocation5 + $0x88] sm:$0xff]
    %v76 = vld [vmem:[#allocation5 + $0x90] sm:$0xff]
    %v77 = vld [vmem:[#allocation5 + $0x98] sm:$0xff]
    %v78 = vld [vmem:[#allocation5 + $0xa0] sm:$0xff]
    %v79 = vld [vmem:[#allocation5 + $0xa8] sm:$0xff]
    %v80 = vld [vmem:[#allocation5 + $0xb0] sm:$0xff]
    %v81 = vld [vmem:[#allocation5 + $0xb8] sm:$0xff]
    %v82 = vld [vmem:[#allocation5 + $0xc0] sm:$0xff]
    %v83 = vld [vmem:[#allocation5 + $0xc8] sm:$0xff]
    %v84 = vld [vmem:[#allocation5 + $0xd0] sm:$0xff]
    %v85 = vld [vmem:[#allocation5 + $0xd8] sm:$0xff]
    %v86 = vld [vmem:[#allocation5 + $0xe0] sm:$0xff]
    %v87 = vld [vmem:[#allocation5 + $0xe8] sm:$0xff]
    %v88 = vld [vmem:[#allocation5 + $0xf0] sm:$0xff]
    %v89 = vld [vmem:[#allocation5 + $0xf8] sm:$0xff]
    %90 = vmatprep.subr.mxu0 %v89
    %91 = vmatpush1.msra.mxu0 %v88
    %92 = vmatprep.subr.mxu0 %v87
    %93 = vmatpush1.msra.mxu0 %v86
    %94 = vmatprep.subr.mxu0 %v85
    %95 = vmatpush1.msra.mxu0 %v84
    %96 = vmatprep.subr.mxu0 %v83
    %97 = vmatpush1.msra.mxu0 %v82
    %98 = vmatprep.subr.mxu0 %v81
    %99 = vmatpush1.msra.mxu0 %v80
    %100 = vmatprep.subr.mxu0 %v79
    %101 = vmatpush1.msra.mxu0 %v78
    %102 = vmatprep.subr.mxu0 %v77
    %103 = vmatpush1.msra.mxu0 %v76
    %104 = vmatprep.subr.mxu0 %v75
    %105 = vmatpush1.msra.mxu0 %v74
    %106 = vmatprep.subr.mxu0 %v73
    %107 = vmatpush1.msra.mxu0 %v72
    %108 = vmatprep.subr.mxu0 %v71
    %109 = vmatpush1.msra.mxu0 %v70
    %110 = vmatprep.subr.mxu0 %v69
    %111 = vmatpush1.msra.mxu0 %v68
    %112 = vmatprep.subr.mxu0 %v67
    %113 = vmatpush1.msra.mxu0 %v66
    %114 = vmatprep.subr.mxu0 %v65
    %115 = vmatpush1.msra.mxu0 %v64
    %116 = vmatprep.subr.mxu0 %v63
    %117 = vmatpush1.msra.mxu0 %v62
    %118 = vmatprep.subr.mxu0 %v61
    %119 = vmatpush1.msra.mxu0 %v60
    %120 = vmatprep.subr.mxu0 %v59
    %121 = vmatpush1.msra.mxu0 %v58
    %122 = vmatprep.subr.mxu0 0.0
    %123 = vmatpush2.msra.mxu0 0.0
    %124 = vmatprep.subr.mxu0 0.0
    %125 = vmatpush2.msra.mxu0 0.0
    %126 = vmatprep.subr.mxu0 0.0
    %127 = vmatpush2.msra.mxu0 0.0
    %128 = vmatprep.subr.mxu0 0.0
    %129 = vmatpush2.msra.mxu0 0.0
    %130 = vmatprep.subr.mxu0 0.0
    %131 = vmatpush2.msra.mxu0 0.0
    %132 = vmatprep.subr.mxu0 0.0
    %133 = vmatpush2.msra.mxu0 0.0
    %134 = vmatprep.subr.mxu0 0.0
    %135 = vmatpush2.msra.mxu0 0.0
    %136 = vmatprep.subr.mxu0 0.0
    %137 = vmatpush2.msra.mxu0 0.0
    %138 = vmatprep.subr.mxu0 0.0
    %139 = vmatpush2.msra.mxu0 0.0
    %140 = vmatprep.subr.mxu0 0.0
    %141 = vmatpush2.msra.mxu0 0.0
    %142 = vmatprep.subr.mxu0 0.0
    %143 = vmatpush2.msra.mxu0 0.0
    %144 = vmatprep.subr.mxu0 0.0
    %145 = vmatpush2.msra.mxu0 0.0
    %146 = vmatprep.subr.mxu0 0.0
    %147 = vmatpush2.msra.mxu0 0.0
    %148 = vmatprep.subr.mxu0 0.0
    %149 = vmatpush2.msra.mxu0 0.0
    %150 = vmatprep.subr.mxu0 0.0
    %151 = vmatpush2.msra.mxu0 0.0
    %152 = vmatprep.subr.mxu0 0.0
    %153 = vmatpush2.msra.mxu0 0.0
    %154 = vmatprep.mubr.f32.mxu0 0.0
    %155 = vmatmul.mubr.f32.gmra.mxu0 %v56
    %v156 = vpop.f32.mrf.mxu0
    %v157 = vadd.f32 0.0, %v156
    %v158 = vpop.f32.mrf.mxu0
    %v159 = vadd.f32 0.0, %v158
    %160 = vmatprep.mubr.f32.mxu0 0.0
    %161 = vmatmul.mubr.f32.gmra.mxu0 %v57
    %v162 = vpop.f32.mrf.mxu0
    %v163 = vadd.f32 0.0, %v162
    %v164 = vpop.f32.mrf.mxu0
    %v165 = vadd.f32 0.0, %v164
    %166 = vdwg.mxu0
    %v167 = vadd.f32 %v56, %v157
    %v168 = vadd.f32 %v57, %v163
    %v169 = vld [vmem:[#allocation7] sm:$0xff]
    %v170 = vld [vmem:[#allocation7 + $0x8] sm:$0xff]
    %v171 = vmul.f32 %v159, %v169
    %v172 = vmul.f32 %v165, %v170
    %v173 = vadd.f32 %v167, %v171
    %v174 = vadd.f32 %v168, %v172
    %175 = vst [vmem:[#allocation8] sm:$0xff] %v173
    %176 = vst [vmem:[#allocation8 + $0x8] sm:$0xff] %v174
    // Predicated region
    $region26: #{tpu_custom_call.1} parent=1 // pred_check
      _
    $region27: #{tpu_custom_call.1} parent=1 // pred_check_branch
      %178 = sbr.rel (0) target = $region29
    $region28: #{tpu_custom_call.1} parent=1 // pred_region
      %s180 = ssub.s32 256, 256
      %181 = vsyncadd [#allocation4], %s180
      %s182 = sshll.u32 [#allocation8], 4
      %s183 = int_to_ptr.vmem [resolvable:$true] %s182
      %188 = dma.vmem_to_hbm [thread:$0]  %s183, 256, %s3, [#allocation4], 128, 128, 8
    $region29: #{tpu_custom_call.1} parent=1 // pred_fallthru
      _
    // Predicated region
    $region30: #{tpu_custom_call.1} parent=1 // pred_check
      _
    $region31: #{tpu_custom_call.1} parent=1 // pred_check_branch
      %190 = sbr.rel (0) target = $region33
    $region32: #{tpu_custom_call.1} parent=1 // pred_region
      %191 = dma.done [#allocation4], 256
    $region33: #{tpu_custom_call.1} parent=1 // pred_fallthru
      _
    %192 = vsyncpa [#allocation3], 1
    %193 = vsyncpa [#allocation6], 1
    %194 = vsyncpa [#allocation4], 1

</llo_original>
